<compile_context>
chip_gen: v5e
topology: v5e:2x2
jax: 0.10.0
libtpu: 0.0.40
codegen_flags: <defaults>
</compile_context>

<pallas_src>
import jax
import jax.numpy as jnp
from jax.experimental import pallas as pl
from jax.experimental.pallas import tpu as pltpu


def _round_up(n, m):
    return ((n + m - 1) // m) * m


def _pad2d(a, rows, cols):
    pr, pc = rows - a.shape[0], cols - a.shape[1]
    if pr == 0 and pc == 0:
        return a
    return jnp.pad(a, ((0, pr), (0, pc)))


def embedding_kernel(x1_ref, x2_ref, x3_ref, w1_ref, b1_ref, w2_ref, b2_ref,
                     o1_ref, o2_ref, o3_ref):
    # x*_ref:  (tile_b, D_in)   bf16, one batch tile per branch
    # w1_ref:  (D_in, H_pad)    bf16      b1_ref: (1, H_pad) f32
    # w2_ref:  (H_pad, E_pad)   bf16      b2_ref: (1, E_pad) f32
    # o*_ref:  (tile_b, E_pad)  f32 (lane-dense, E_pad % 128 == 0)
    tb = x1_ref.shape[0]

    # Fold the 3 triplet branches into the matmul M dimension (3*tb rows).
    x = jnp.concatenate([x1_ref[...], x2_ref[...], x3_ref[...]], axis=0)

    # Layer 1: bf16 MXU matmul, f32 accumulation; f32 bias + ReLU epilogue.
    h = jnp.dot(x, w1_ref[...], preferred_element_type=jnp.float32)
    h = jnp.maximum(h + b1_ref[...], 0.0)

    # Layer 2: downcast activations to bf16 for the MXU, accumulate in f32.
    o = jnp.dot(h.astype(w2_ref.dtype), w2_ref[...],
                preferred_element_type=jnp.float32)
    o = (o + b2_ref[...]).astype(o1_ref.dtype)

    o1_ref[...] = o[0 * tb:1 * tb, :]
    o2_ref[...] = o[1 * tb:2 * tb, :]
    o3_ref[...] = o[2 * tb:3 * tb, :]


def triplet_net(x1, x2, x3, w1, b1, w2, b2):
    """Shared-weight 2-layer-MLP embedding applied to the 3 triplet branches."""
    B, D_in = x1.shape
    H = w1.shape[1]
    E = w2.shape[1]

    # Lane-dense padding of the feature dims (biggest measured store lever).
    H_pad = _round_up(H, 128)
    E_pad = _round_up(E, 128)

    # Batch-tile axis (the only grid axis; "parallel" so v7x's 2 TCs split it).
    B_pad = _round_up(B, 8)
    tile_b = B_pad if B_pad <= 256 else 128
    B_pad = _round_up(B_pad, tile_b)
    grid = (B_pad // tile_b,)

    # bf16 operands for the MXU; f32 biases for the epilogue.
    def prep_x(x):
        return _pad2d(x.astype(jnp.bfloat16), B_pad, D_in)

    x1p, x2p, x3p = prep_x(x1), prep_x(x2), prep_x(x3)
    w1p = _pad2d(w1.astype(jnp.bfloat16), D_in, H_pad)
    b1p = _pad2d(b1.reshape(1, H).astype(jnp.float32), 1, H_pad)
    w2p = _pad2d(w2.astype(jnp.bfloat16), H_pad, E_pad)
    b2p = _pad2d(b2.reshape(1, E).astype(jnp.float32), 1, E_pad)

    x_spec = pl.BlockSpec((tile_b, D_in), lambda i: (i, 0))
    o_spec = pl.BlockSpec((tile_b, E_pad), lambda i: (i, 0))

    o1, o2, o3 = pl.pallas_call(
        embedding_kernel,
        out_shape=[jax.ShapeDtypeStruct((B_pad, E_pad), jnp.float32)] * 3,
        grid_spec=pltpu.PrefetchScalarGridSpec(
            num_scalar_prefetch=0,
            grid=grid,
            in_specs=[
                x_spec, x_spec, x_spec,
                # Weights/biases: constant index_map -> resident across steps.
                pl.BlockSpec((D_in, H_pad), lambda i: (0, 0)),
                pl.BlockSpec((1, H_pad), lambda i: (0, 0)),
                pl.BlockSpec((H_pad, E_pad), lambda i: (0, 0)),
                pl.BlockSpec((1, E_pad), lambda i: (0, 0)),
            ],
            out_specs=[o_spec, o_spec, o_spec],
        ),
        compiler_params=pltpu.CompilerParams(
            dimension_semantics=("parallel",),
        ),
    )(x1p, x2p, x3p, w1p, b1p, w2p, b2p)

    return o1[:B, :E], o2[:B, :E], o3[:B, :E]


def _matched_reference(x1, x2, x3, w1, b1, w2, b2):
    """Reference with the same bf16-operand / f32-accumulate recipe as the kernel."""
    w1b, w2b = w1.astype(jnp.bfloat16), w2.astype(jnp.bfloat16)

    def emb(x):
        h = jnp.dot(x.astype(jnp.bfloat16), w1b,
                    preferred_element_type=jnp.float32) + b1
        h = jnp.maximum(h, 0.0).astype(jnp.bfloat16)
        return jnp.dot(h, w2b, preferred_element_type=jnp.float32) + b2

    return emb(x1), emb(x2), emb(x3)


def _f32_reference(x1, x2, x3, w1, b1, w2, b2):
    def emb(x):
        h = jnp.maximum(x @ w1 + b1, 0.0)
        return h @ w2 + b2
    return emb(x1), emb(x2), emb(x3)


if __name__ == "__main__":
    # Small, forward-consistent shapes.
    B, D_in, H, E = 8, 32, 64, 32

    key = jax.random.PRNGKey(0)
    k1, k2, k3, kw1, kb1, kw2, kb2 = jax.random.split(key, 7)

    x1 = jax.random.normal(k1, (B, D_in), dtype=jnp.float32)
    x2 = jax.random.normal(k2, (B, D_in), dtype=jnp.float32)
    x3 = jax.random.normal(k3, (B, D_in), dtype=jnp.float32)

    # Deterministic parameter init (synthetic, no checkpoint load).
    w1 = jax.random.normal(kw1, (D_in, H), dtype=jnp.float32) * 0.1
    b1 = jax.random.normal(kb1, (H,), dtype=jnp.float32) * 0.01
    w2 = jax.random.normal(kw2, (H, E), dtype=jnp.float32) * 0.1
    b2 = jax.random.normal(kb2, (E,), dtype=jnp.float32) * 0.01

    o1, o2, o3 = jax.jit(triplet_net)(x1, x2, x3, w1, b1, w2, b2)
    jax.block_until_ready((o1, o2, o3))

    assert o1.shape == (B, E) and o2.shape == (B, E) and o3.shape == (B, E)

    # Exact-recipe (bf16 operands, f32 accumulation) reference.
    m1, m2, m3 = _matched_reference(x1, x2, x3, w1, b1, w2, b2)
    assert jnp.allclose(o1, m1, atol=1e-3, rtol=1e-3)
    assert jnp.allclose(o2, m2, atol=1e-3, rtol=1e-3)
    assert jnp.allclose(o3, m3, atol=1e-3, rtol=1e-3)

    # Loose sanity check against the pure-f32 math.
    r1, r2, r3 = _f32_reference(x1, x2, x3, w1, b1, w2, b2)
    assert jnp.allclose(o1, r1, atol=1e-1, rtol=1e-1)
    assert jnp.allclose(o2, r2, atol=1e-1, rtol=1e-1)
    assert jnp.allclose(o3, r3, atol=1e-1, rtol=1e-1)

    print("KERNEL_OK")
</pallas_src>

<mosaic_0001>
module attributes {stable_mosaic.version = 11 : i64} {
  func.func @embedding_kernel(%arg0: i32, %arg1: memref<8x32xbf16, #tpu.memory_space<vmem>>, %arg2: memref<8x32xbf16, #tpu.memory_space<vmem>>, %arg3: memref<8x32xbf16, #tpu.memory_space<vmem>>, %arg4: memref<32x128xbf16, #tpu.memory_space<vmem>>, %arg5: memref<1x128xf32, #tpu.memory_space<vmem>>, %arg6: memref<128x128xbf16, #tpu.memory_space<vmem>>, %arg7: memref<1x128xf32, #tpu.memory_space<vmem>>, %arg8: memref<8x128xf32, #tpu.memory_space<vmem>>, %arg9: memref<8x128xf32, #tpu.memory_space<vmem>>, %arg10: memref<8x128xf32, #tpu.memory_space<vmem>>) attributes {dimension_semantics = [#tpu.dimension_semantics<parallel>], iteration_bounds = array<i64: 1>, scalar_prefetch = 0 : i64, scratch_operands = 0 : i64, tpu.core_type = #tpu.core_type<tc>, window_params = [{transform_indices = @transform_0, window_bounds = array<i64: 8, 32>}, {transform_indices = @transform_1, window_bounds = array<i64: 8, 32>}, {transform_indices = @transform_2, window_bounds = array<i64: 8, 32>}, {pipeline_mode = #tpu.pipeline_mode<synchronous>, transform_indices = @transform_3, window_bounds = array<i64: 32, 128>}, {pipeline_mode = #tpu.pipeline_mode<synchronous>, transform_indices = @transform_4, window_bounds = array<i64: 1, 128>}, {pipeline_mode = #tpu.pipeline_mode<synchronous>, transform_indices = @transform_5, window_bounds = array<i64: 128, 128>}, {pipeline_mode = #tpu.pipeline_mode<synchronous>, transform_indices = @transform_6, window_bounds = array<i64: 1, 128>}, {transform_indices = @transform_7, window_bounds = array<i64: 8, 128>}, {transform_indices = @transform_8, window_bounds = array<i64: 8, 128>}, {transform_indices = @transform_9, window_bounds = array<i64: 8, 128>}]} {
    %c0 = arith.constant 0 : index
    %c0_0 = arith.constant 0 : index
    %0 = vector.load %arg1[%c0, %c0_0] : memref<8x32xbf16, #tpu.memory_space<vmem>>, vector<8x32xbf16>
    %c0_1 = arith.constant 0 : index
    %c0_2 = arith.constant 0 : index
    %1 = vector.load %arg2[%c0_1, %c0_2] : memref<8x32xbf16, #tpu.memory_space<vmem>>, vector<8x32xbf16>
    %c0_3 = arith.constant 0 : index
    %c0_4 = arith.constant 0 : index
    %2 = vector.load %arg3[%c0_3, %c0_4] : memref<8x32xbf16, #tpu.memory_space<vmem>>, vector<8x32xbf16>
    %3 = tpu.concatenate %0, %1, %2 in 0 : vector<8x32xbf16>, vector<8x32xbf16>, vector<8x32xbf16> -> vector<24x32xbf16>
    %c0_5 = arith.constant 0 : index
    %c0_6 = arith.constant 0 : index
    %4 = vector.load %arg4[%c0_5, %c0_6] : memref<32x128xbf16, #tpu.memory_space<vmem>>, vector<32x128xbf16>
    %cst = arith.constant dense<0.000000e+00> : vector<24x128xf32>
    %5 = tpu.matmul %3, %4, %cst {dimension_numbers = #tpu.dot_dimension_numbers<[1], [0], [0], [1], [0, 0, 1, 1], [], []>} : vector<24x32xbf16>, vector<32x128xbf16>, vector<24x128xf32> -> vector<24x128xf32>
    %c0_7 = arith.constant 0 : index
    %c0_8 = arith.constant 0 : index
    %6 = vector.load %arg5[%c0_7, %c0_8] : memref<1x128xf32, #tpu.memory_space<vmem>>, vector<1x128xf32>
    %7 = vector.broadcast %6 : vector<1x128xf32> to vector<24x128xf32>
    %8 = arith.addf %5, %7 : vector<24x128xf32>
    %cst_9 = arith.constant 0.000000e+00 : f32
    %9 = vector.broadcast %cst_9 : f32 to vector<24x128xf32>
    %10 = arith.maximumf %8, %9 : vector<24x128xf32>
    %11 = arith.truncf %10 : vector<24x128xf32> to vector<24x128xbf16>
    %c0_10 = arith.constant 0 : index
    %c0_11 = arith.constant 0 : index
    %12 = vector.load %arg6[%c0_10, %c0_11] : memref<128x128xbf16, #tpu.memory_space<vmem>>, vector<128x128xbf16>
    %cst_12 = arith.constant dense<0.000000e+00> : vector<24x128xf32>
    %13 = tpu.matmul %11, %12, %cst_12 {dimension_numbers = #tpu.dot_dimension_numbers<[1], [0], [0], [1], [0, 0, 1, 1], [], []>} : vector<24x128xbf16>, vector<128x128xbf16>, vector<24x128xf32> -> vector<24x128xf32>
    %c0_13 = arith.constant 0 : index
    %c0_14 = arith.constant 0 : index
    %14 = vector.load %arg7[%c0_13, %c0_14] : memref<1x128xf32, #tpu.memory_space<vmem>>, vector<1x128xf32>
    %15 = vector.broadcast %14 : vector<1x128xf32> to vector<24x128xf32>
    %16 = arith.addf %13, %15 : vector<24x128xf32>
    %17 = vector.extract_strided_slice %16 {offsets = [0, 0], sizes = [8, 128], strides = [1, 1]} : vector<24x128xf32> to vector<8x128xf32>
    %c0_15 = arith.constant 0 : index
    %c0_16 = arith.constant 0 : index
    %18 = vector.load %arg8[%c0_15, %c0_16] : memref<8x128xf32, #tpu.memory_space<vmem>>, vector<8x128xf32>
    tpu.vector_store %arg8[%c0_15, %c0_16], %17 {strides = array<i32>} : memref<8x128xf32, #tpu.memory_space<vmem>>, vector<8x128xf32>,
    %19 = vector.extract_strided_slice %16 {offsets = [8, 0], sizes = [8, 128], strides = [1, 1]} : vector<24x128xf32> to vector<8x128xf32>
    %c0_17 = arith.constant 0 : index
    %c0_18 = arith.constant 0 : index
    %20 = vector.load %arg9[%c0_17, %c0_18] : memref<8x128xf32, #tpu.memory_space<vmem>>, vector<8x128xf32>
    tpu.vector_store %arg9[%c0_17, %c0_18], %19 {strides = array<i32>} : memref<8x128xf32, #tpu.memory_space<vmem>>, vector<8x128xf32>,
    %21 = vector.extract_strided_slice %16 {offsets = [16, 0], sizes = [8, 128], strides = [1, 1]} : vector<24x128xf32> to vector<8x128xf32>
    %c0_19 = arith.constant 0 : index
    %c0_20 = arith.constant 0 : index
    %22 = vector.load %arg10[%c0_19, %c0_20] : memref<8x128xf32, #tpu.memory_space<vmem>>, vector<8x128xf32>
    tpu.vector_store %arg10[%c0_19, %c0_20], %21 {strides = array<i32>} : memref<8x128xf32, #tpu.memory_space<vmem>>, vector<8x128xf32>,
    return
  }
  func.func @transform_0(%arg0: i32) -> (i32, i32) {
    %c0_i32 = arith.constant 0 : i32
    %c0_i32_0 = arith.constant 0 : i32
    return %arg0, %c0_i32 : i32, i32
  }
  func.func @transform_1(%arg0: i32) -> (i32, i32) {
    %c0_i32 = arith.constant 0 : i32
    %c0_i32_0 = arith.constant 0 : i32
    return %arg0, %c0_i32 : i32, i32
  }
  func.func @transform_2(%arg0: i32) -> (i32, i32) {
    %c0_i32 = arith.constant 0 : i32
    %c0_i32_0 = arith.constant 0 : i32
    return %arg0, %c0_i32 : i32, i32
  }
  func.func @transform_3(%arg0: i32) -> (i32, i32) {
    %c0_i32 = arith.constant 0 : i32
    %c0_i32_0 = arith.constant 0 : i32
    %c0_i32_1 = arith.constant 0 : i32
    return %c0_i32, %c0_i32_0 : i32, i32
  }
  func.func @transform_4(%arg0: i32) -> (i32, i32) {
    %c0_i32 = arith.constant 0 : i32
    %c0_i32_0 = arith.constant 0 : i32
    %c0_i32_1 = arith.constant 0 : i32
    return %c0_i32, %c0_i32_0 : i32, i32
  }
  func.func @transform_5(%arg0: i32) -> (i32, i32) {
    %c0_i32 = arith.constant 0 : i32
    %c0_i32_0 = arith.constant 0 : i32
    %c0_i32_1 = arith.constant 0 : i32
    return %c0_i32, %c0_i32_0 : i32, i32
  }
  func.func @transform_6(%arg0: i32) -> (i32, i32) {
    %c0_i32 = arith.constant 0 : i32
    %c0_i32_0 = arith.constant 0 : i32
    %c0_i32_1 = arith.constant 0 : i32
    return %c0_i32, %c0_i32_0 : i32, i32
  }
  func.func @transform_7(%arg0: i32) -> (i32, i32) {
    %c0_i32 = arith.constant 0 : i32
    %c0_i32_0 = arith.constant 0 : i32
    return %arg0, %c0_i32 : i32, i32
  }
  func.func @transform_8(%arg0: i32) -> (i32, i32) {
    %c0_i32 = arith.constant 0 : i32
    %c0_i32_0 = arith.constant 0 : i32
    return %arg0, %c0_i32 : i32, i32
  }
  func.func @transform_9(%arg0: i32) -> (i32, i32) {
    %c0_i32 = arith.constant 0 : i32
    %c0_i32_0 = arith.constant 0 : i32
    return %arg0, %c0_i32 : i32, i32
  }
}

</mosaic_0001>

<llo_original>
// kernel: triplet_net.1
$region0: #{triplet_net.1}
  #allocation0 [shape = 'u32[]', space=smem, size = 0x4, offset = 0x4, fixed_abs, tag = 'smem constant byte address 0x4 - core index']
  #allocation1 [shape = 'u32[72,128]{1,0:T(1,128)}', space=vmem, size = 0x9000, scoped, tag = 'internal scratch']
  %s0 = inlined_call_operand.vmem [shape: bf16[8,32], index: 0, kind: input, shape index: {}]
  %s1 = inlined_call_operand.vmem [shape: bf16[8,32], index: 1, kind: input, shape index: {}]
  %s2 = inlined_call_operand.vmem [shape: bf16[8,32], index: 2, kind: input, shape index: {}]
  %s3 = inlined_call_operand.vmem [shape: bf16[32,128], index: 3, kind: input, shape index: {}]
  %s4 = inlined_call_operand.vmem [shape: f32[1,128], index: 4, kind: input, shape index: {}]
  %s5 = inlined_call_operand.vmem [shape: bf16[128,128], index: 5, kind: input, shape index: {}]
  %s6 = inlined_call_operand.vmem [shape: f32[1,128], index: 6, kind: input, shape index: {}]
  %s7 = inlined_call_operand.hbm [shape: f32[8,128], index: 7, kind: output, shape index: {0}]
  %s8 = inlined_call_operand.hbm [shape: f32[8,128], index: 8, kind: output, shape index: {1}]
  %s9 = inlined_call_operand.hbm [shape: f32[8,128], index: 9, kind: output, shape index: {2}]
  %10 = xla_tuple %s7, %s8, %s9
  %s11 = sld [smem:[#allocation0]]
  $region54: #{triplet_net.1} parent=0
    _
  %s13 = ssub.s32 1, %s11
  %s14 = scalar_select 0, %s13, %s11
  $region1: #{triplet_net.1} parent=0
    #allocation2 [shape = 'u8[4096]{0}', space=vmem, size = 0x1000, scoped, tag = 'output window, operand 0, single buffered']
    #allocation3 [shape = 's32[1]{0}', space=sflag, size = 0x4, scoped, tag = 'scoped memory for triplet_net.1']
    #allocation4 [shape = 'u8[4096]{0}', space=vmem, size = 0x1000, scoped, tag = 'output window, operand 1, single buffered']
    #allocation5 [shape = 's32[1]{0}', space=sflag, size = 0x4, scoped, tag = 'scoped memory for triplet_net.1']
    #allocation6 [shape = 'u8[4096]{0}', space=vmem, size = 0x1000, scoped, tag = 'output window, operand 2, single buffered']
    %15 = vsyncpa [#allocation3], 0
    %16 = vsyncpa [#allocation5], 0
    // Predicated region
    $region2: #{triplet_net.1} parent=1 // pred_check
      _
    $region3: #{triplet_net.1} parent=1 // pred_check_branch
      %18 = sbr.rel (0) target = $region5
    $region4: #{triplet_net.1} parent=1 // pred_region
      _
    $region5: #{triplet_net.1} parent=1 // pred_fallthru
      _
    // Predicated region
    $region6: #{triplet_net.1} parent=1 // pred_check
      _
    $region7: #{triplet_net.1} parent=1 // pred_check_branch
      %20 = sbr.rel (0) target = $region9
    $region8: #{triplet_net.1} parent=1 // pred_region
      _
    $region9: #{triplet_net.1} parent=1 // pred_fallthru
      _
    // Predicated region
    $region10: #{triplet_net.1} parent=1 // pred_check
      _
    $region11: #{triplet_net.1} parent=1 // pred_check_branch
      %22 = sbr.rel (0) target = $region13
    $region12: #{triplet_net.1} parent=1 // pred_region
      _
    $region13: #{triplet_net.1} parent=1 // pred_fallthru
      _
    // Predicated region
    $region14: #{triplet_net.1} parent=1 // pred_check
      _
    $region15: #{triplet_net.1} parent=1 // pred_check_branch
      %24 = sbr.rel (0) target = $region17
    $region16: #{triplet_net.1} parent=1 // pred_region
      _
    $region17: #{triplet_net.1} parent=1 // pred_fallthru
      _
    // Predicated region
    $region18: #{triplet_net.1} parent=1 // pred_check
      _
    $region19: #{triplet_net.1} parent=1 // pred_check_branch
      %26 = sbr.rel (0) target = $region21
    $region20: #{triplet_net.1} parent=1 // pred_region
      _
    $region21: #{triplet_net.1} parent=1 // pred_fallthru
      _
    // Predicated region
    $region22: #{triplet_net.1} parent=1 // pred_check
      _
    $region23: #{triplet_net.1} parent=1 // pred_check_branch
      %28 = sbr.rel (0) target = $region25
    $region24: #{triplet_net.1} parent=1 // pred_region
      _
    $region25: #{triplet_net.1} parent=1 // pred_fallthru
      _
    // Predicated region
    $region26: #{triplet_net.1} parent=1 // pred_check
      _
    $region27: #{triplet_net.1} parent=1 // pred_check_branch
      %30 = sbr.rel (0) target = $region29
    $region28: #{triplet_net.1} parent=1 // pred_region
      _
    $region29: #{triplet_net.1} parent=1 // pred_fallthru
      _
    %v32 = vld [vmem:[%s0] sm:$0xf]
    %v33 = vld [vmem:[%s1] sm:$0xf]
    %v34 = vld [vmem:[%s2] sm:$0xf]
    %v36 = vunpack.c.l.b16 %v33
    %v37 = vpack.c.b16 %v36, %v36
    %vm38 = vcmask 1043456
    %v41 = vsel %vm38, %v32, %v37
    %v42 = vld [vmem:[%s3] sm:$0xf]
    %v43 = vld [vmem:[%s3 + $0x4] sm:$0xf]
    %v44 = vld [vmem:[%s3 + $0x8] sm:$0xf]
    %v45 = vld [vmem:[%s3 + $0xc] sm:$0xf]
    %v46 = vld [vmem:[%s4] sm:$0x1]
    %v48 = vperm.slane %v46, 0
    %v54 = vunpack.c.l.b16 %v42
    %v55 = vunpack.c.l.b16 %v43
    %v56 = vunpack.c.l.b16 %v44
    %v57 = vunpack.c.l.b16 %v45
    %v58 = vpack.c.b16 %v55, %v54
    %v59 = vpack.c.b16 %v57, %v56
    %vm62 = vcmask 261120
    %v63 = vsel %vm62, %v41, 0
    %v66 = vsel %vm62, %v34, 0
    %68 = vmatpush.bf16.msra.mxu0 0
    %69 = vmatpush.bf16.msra.mxu0 0
    %70 = vmatpush.bf16.msra.mxu0 0
    %71 = vmatpush.bf16.msra.mxu0 0
    %72 = vmatpush.bf16.msra.mxu0 0
    %73 = vmatpush.bf16.msra.mxu0 0
    %74 = vmatpush.bf16.msra.mxu0 %v59
    %75 = vmatpush.bf16.msra.mxu0 %v58
    %76 = vmatmul.bf16.gmra.mxu0 %v63
    %v77 = vpop.f32.mrf.mxu0
    %v78 = vadd.f32 %v48, %v77
    %v79 = vpop.f32.mrf.mxu0
    %v80 = vadd.f32 %v48, %v79
    %81 = vmatmul.bf16.gmra.mxu0 %v66
    %v82 = vpop.f32.mrf.mxu0
    %v83 = vadd.f32 %v48, %v82
    %v84 = vpop.f32.mrf.mxu0
    %85 = vdwg.mxu0
    %v86 = vmax.f32 %v78, 0.0
    %v87 = vmax.f32 %v80, 0.0
    %v88 = vmax.f32 %v83, 0.0
    %v89 = vpack.c.bf16 %v87, %v86
    %v90 = vpack.c.bf16 %v88, %v88
    %v91 = vld [vmem:[%s5] sm:$0xf]
    %v92 = vld [vmem:[%s5 + $0x4] sm:$0xf]
    %v93 = vld [vmem:[%s5 + $0x8] sm:$0xf]
    %v94 = vld [vmem:[%s5 + $0xc] sm:$0xf]
    %v95 = vld [vmem:[%s5 + $0x10] sm:$0xf]
    %v96 = vld [vmem:[%s5 + $0x14] sm:$0xf]
    %v97 = vld [vmem:[%s5 + $0x18] sm:$0xf]
    %v98 = vld [vmem:[%s5 + $0x1c] sm:$0xf]
    %v99 = vld [vmem:[%s5 + $0x20] sm:$0xf]
    %v100 = vld [vmem:[%s5 + $0x24] sm:$0xf]
    %v101 = vld [vmem:[%s5 + $0x28] sm:$0xf]
    %v102 = vld [vmem:[%s5 + $0x2c] sm:$0xf]
    %v103 = vld [vmem:[%s5 + $0x30] sm:$0xf]
    %v104 = vld [vmem:[%s5 + $0x34] sm:$0xf]
    %v105 = vld [vmem:[%s5 + $0x38] sm:$0xf]
    %v106 = vld [vmem:[%s5 + $0x3c] sm:$0xf]
    %v107 = vld [vmem:[%s6] sm:$0x1]
    %v109 = vperm.slane %v107, 0
    %v127 = vunpack.c.l.b16 %v91
    %v128 = vunpack.c.l.b16 %v92
    %v129 = vunpack.c.l.b16 %v93
    %v130 = vunpack.c.l.b16 %v94
    %v131 = vunpack.c.l.b16 %v95
    %v132 = vunpack.c.l.b16 %v96
    %v133 = vunpack.c.l.b16 %v97
    %v134 = vunpack.c.l.b16 %v98
    %v135 = vunpack.c.l.b16 %v99
    %v136 = vunpack.c.l.b16 %v100
    %v137 = vunpack.c.l.b16 %v101
    %v138 = vunpack.c.l.b16 %v102
    %v139 = vunpack.c.l.b16 %v103
    %v140 = vunpack.c.l.b16 %v104
    %v141 = vunpack.c.l.b16 %v105
    %v142 = vunpack.c.l.b16 %v106
    %v143 = vpack.c.b16 %v128, %v127
    %v144 = vpack.c.b16 %v130, %v129
    %v145 = vpack.c.b16 %v132, %v131
    %v146 = vpack.c.b16 %v134, %v133
    %v147 = vpack.c.b16 %v136, %v135
    %v148 = vpack.c.b16 %v138, %v137
    %v149 = vpack.c.b16 %v140, %v139
    %v150 = vpack.c.b16 %v142, %v141
    %159 = vmatpush.bf16.msra.mxu0 %v150
    %160 = vmatpush.bf16.msra.mxu0 %v149
    %161 = vmatpush.bf16.msra.mxu0 %v148
    %162 = vmatpush.bf16.msra.mxu0 %v147
    %163 = vmatpush.bf16.msra.mxu0 %v146
    %164 = vmatpush.bf16.msra.mxu0 %v145
    %165 = vmatpush.bf16.msra.mxu0 %v144
    %166 = vmatpush.bf16.msra.mxu0 %v143
    %167 = vmatmul.bf16.gmra.mxu0 %v89
    %v168 = vpop.f32.mrf.mxu0
    %v169 = vadd.f32 %v109, %v168
    %v170 = vpop.f32.mrf.mxu0
    %v171 = vadd.f32 %v109, %v170
    %172 = vmatmul.bf16.gmra.mxu0 %v90
    %v173 = vpop.f32.mrf.mxu0
    %v174 = vadd.f32 %v109, %v173
    %v175 = vpop.f32.mrf.mxu0
    %176 = vdwg.mxu0
    %177 = vst [vmem:[#allocation2] sm:$0xff] %v169
    %178 = vst [vmem:[#allocation4] sm:$0xff] %v171
    %179 = vst [vmem:[#allocation6] sm:$0xff] %v174
    // Predicated region
    $region30: #{triplet_net.1} parent=1 // pred_check
      _
    $region31: #{triplet_net.1} parent=1 // pred_check_branch
      %181 = sbr.rel (0) target = $region33
    $region32: #{triplet_net.1} parent=1 // pred_region
      %183 = vsyncadd [#allocation3], 0
      %s185 = sshll.u32 [#allocation2], 4
      %s186 = int_to_ptr.vmem [resolvable:$true] %s185
      %s187 = sshll.u32 %s7, 4
      %s188 = int_to_ptr.hbm [resolvable:$true] %s187
      %190 = dma.vmem_to_hbm [thread:$0]  %s186, 128, %s188, [#allocation3]
    $region33: #{triplet_net.1} parent=1 // pred_fallthru
      _
    // Predicated region
    $region34: #{triplet_net.1} parent=1 // pred_check
      _
    $region35: #{triplet_net.1} parent=1 // pred_check_branch
      %192 = sbr.rel (0) target = $region37
    $region36: #{triplet_net.1} parent=1 // pred_region
      %194 = vsyncadd [#allocation5], 0
      %s196 = sshll.u32 [#allocation4], 4
      %s197 = int_to_ptr.vmem [resolvable:$true] %s196
      %s198 = sshll.u32 %s8, 4
      %s199 = int_to_ptr.hbm [resolvable:$true] %s198
      %201 = dma.vmem_to_hbm [thread:$0]  %s197, 128, %s199, [#allocation5]
    $region37: #{triplet_net.1} parent=1 // pred_fallthru
      _
    // Predicated region
    $region38: #{triplet_net.1} parent=1 // pred_check
      _
    $region39: #{triplet_net.1} parent=1 // pred_check_branch
      %203 = sbr.rel (0) target = $region41
    $region40: #{triplet_net.1} parent=1 // pred_region
      %205 = vsyncadd [#allocation5], 0
      %s207 = sshll.u32 [#allocation6], 4
      %s208 = int_to_ptr.vmem [resolvable:$true] %s207
      %s209 = sshll.u32 %s9, 4
      %s210 = int_to_ptr.hbm [resolvable:$true] %s209
      %212 = dma.vmem_to_hbm [thread:$0]  %s208, 128, %s210, [#allocation5]
    $region41: #{triplet_net.1} parent=1 // pred_fallthru
      _
    // Predicated region
    $region42: #{triplet_net.1} parent=1 // pred_check
      _
    $region43: #{triplet_net.1} parent=1 // pred_check_branch
      %214 = sbr.rel (0) target = $region45
    $region44: #{triplet_net.1} parent=1 // pred_region
      %216 = dma.done [#allocation3], 128
    $region45: #{triplet_net.1} parent=1 // pred_fallthru
      _
    // Predicated region
    $region46: #{triplet_net.1} parent=1 // pred_check
      _
    $region47: #{triplet_net.1} parent=1 // pred_check_branch
      %218 = sbr.rel (0) target = $region49
    $region48: #{triplet_net.1} parent=1 // pred_region
      %220 = dma.done [#allocation5], 128
    $region49: #{triplet_net.1} parent=1 // pred_fallthru
      _
    // Predicated region
    $region50: #{triplet_net.1} parent=1 // pred_check
      _
    $region51: #{triplet_net.1} parent=1 // pred_check_branch
      %222 = sbr.rel (0) target = $region53
    $region52: #{triplet_net.1} parent=1 // pred_region
      %224 = dma.done [#allocation5], 128
    $region53: #{triplet_net.1} parent=1 // pred_fallthru
      _
    %225 = vsyncpa [#allocation3], 1
    %226 = vsyncpa [#allocation5], 1

</llo_original>
